<compile_context>
chip_gen: v6e
topology: v6e:2x2x1
jax: 0.10.0
libtpu: 0.0.40
codegen_flags: <defaults>
</compile_context>

<pallas_src>
import functools

import jax
import jax.numpy as jnp
from jax.experimental import pallas as pl
from jax.experimental.pallas import tpu as pltpu


def _rtfm_kernel(sl_ref, feat_n_ref, feat_a_ref, o_ref, *, alpha, margin):
    # --- classification loss: PyTorch BCELoss (reduction='mean', log clamped at -100) ---
    s = sl_ref[0:1, :]                                   # (1, L) scores in (0, 1)
    y = sl_ref[1:2, :]                                   # (1, L) labels
    log_s = jnp.maximum(jnp.log(s), -100.0)
    log_1ms = jnp.maximum(jnp.log(1.0 - s), -100.0)
    bce = -(y * log_s + (1.0 - y) * log_1ms)
    n_scores = s.shape[-1]                               # static
    loss_cls = jnp.sum(bce) * (1.0 / n_scores)

    # --- RTFM feature-magnitude loss (VPU/XLU reductions; MXU deliberately unused) ---
    fn = feat_n_ref[...]                                 # (B, T, D) unpadded
    fa = feat_a_ref[...]
    n_batch, n_seg, _ = fn.shape                         # static
    inv_t = 1.0 / n_seg
    mean_n = jnp.sum(fn, axis=1) * inv_t                 # (B, D) == mean over dim 1
    mean_a = jnp.sum(fa, axis=1) * inv_t
    norm_n = jnp.sqrt(jnp.sum(mean_n * mean_n, axis=-1, keepdims=True))  # (B, 1)
    norm_a = jnp.sqrt(jnp.sum(mean_a * mean_a, axis=-1, keepdims=True))
    loss_abn = jnp.abs(jnp.float32(margin) - norm_a)
    loss_rtfm = jnp.sum((loss_abn + norm_n) ** 2) * (1.0 / n_batch)

    o_ref[0, 0] = loss_cls + jnp.float32(alpha) * loss_rtfm


def rtfm_loss(score_normal, score_abnormal, nlabel, alabel, feat_n, feat_a,
              *, alpha, margin, device=None):
    """Equivalent of RTFM_loss(alpha, margin, device).forward(...)."""
    del device  # host-side .to(device) plumbing has no kernel equivalent

    # label = cat(as_tensor([nlabel]), as_tensor([alabel])); score = cat(scores).squeeze()
    sn = jnp.asarray(score_normal, jnp.float32).reshape(-1)
    sa = jnp.asarray(score_abnormal, jnp.float32).reshape(-1)
    nl = jnp.asarray(nlabel, jnp.float32).reshape(-1)
    al = jnp.asarray(alabel, jnp.float32).reshape(-1)
    n_scores = int(sn.shape[0] + sa.shape[0])
    assert n_scores == int(nl.shape[0] + al.shape[0]), "score/label count mismatch"
    # One packed (2, L) slab: row 0 = scores, row 1 = labels -> a single tiny DMA.
    sl = jnp.concatenate([sn, sa, nl, al]).reshape(2, n_scores)

    feat_n = jnp.asarray(feat_n, jnp.float32)
    feat_a = jnp.asarray(feat_a, jnp.float32)
    assert feat_n.shape == feat_a.shape and feat_n.ndim == 3
    n_batch, n_seg, n_dim = feat_n.shape

    kernel = functools.partial(_rtfm_kernel, alpha=float(alpha), margin=float(margin))

    feat_elems = int(n_batch) * int(n_seg) * int(n_dim)
    cost = pl.CostEstimate(
        flops=2 * (feat_elems + 3 * int(n_batch) * int(n_dim)) + 16 * n_scores,
        transcendentals=2 * n_scores + 2 * int(n_batch),
        bytes_accessed=4 * (2 * feat_elems + 2 * n_scores + 1),
    )

    out = pl.pallas_call(
        kernel,
        out_shape=jax.ShapeDtypeStruct((1, 1), jnp.float32),
        # Gridless: one invocation, whole unpadded arrays resident in VMEM,
        # no double-buffering / pipeline machinery for a few-KiB problem.
        in_specs=[
            pl.BlockSpec(memory_space=pltpu.MemorySpace.VMEM),   # packed score/label (2, L)
            pl.BlockSpec(memory_space=pltpu.MemorySpace.VMEM),   # feat_n (B, T, D)
            pl.BlockSpec(memory_space=pltpu.MemorySpace.VMEM),   # feat_a (B, T, D)
        ],
        out_specs=pl.BlockSpec(memory_space=pltpu.MemorySpace.SMEM),
        cost_estimate=cost,
    )(sl, feat_n, feat_a)
    return out[0, 0]


if __name__ == "__main__":
    key = jax.random.PRNGKey(0)
    k1, k2, k3, k4 = jax.random.split(key, 4)

    # Small shapes consistent with the module's forward:
    #   scores (1,1) each, scalar labels 0/1, features (batch=2, seq=8, hidden=32).
    B_feat, T, D = 2, 8, 32
    score_normal = jax.nn.sigmoid(jax.random.normal(k1, (1, 1), dtype=jnp.float32))
    score_abnormal = jax.nn.sigmoid(jax.random.normal(k2, (1, 1), dtype=jnp.float32))
    nlabel = jnp.float32(0.0)
    alabel = jnp.float32(1.0)
    feat_n = jax.random.normal(k3, (B_feat, T, D), dtype=jnp.float32)
    feat_a = jax.random.normal(k4, (B_feat, T, D), dtype=jnp.float32)
    alpha, margin = 0.0001, 100.0  # RTFM defaults

    loss = rtfm_loss(score_normal, score_abnormal, nlabel, alabel,
                     feat_n, feat_a, alpha=alpha, margin=margin)
    jax.block_until_ready(loss)

    # Pure-JAX reference of the PyTorch forward.
    label = jnp.concatenate([jnp.reshape(nlabel, (-1,)),
                             jnp.reshape(alabel, (-1,))]).astype(jnp.float32)
    score = jnp.concatenate([score_normal, score_abnormal], axis=0).reshape(-1)
    loss_cls = jnp.mean(-(label * jnp.maximum(jnp.log(score), -100.0)
                          + (1.0 - label) * jnp.maximum(jnp.log(1.0 - score), -100.0)))
    loss_abn = jnp.abs(margin - jnp.linalg.norm(jnp.mean(feat_a, axis=1), axis=1))
    loss_nor = jnp.linalg.norm(jnp.mean(feat_n, axis=1), axis=1)
    loss_rtfm = jnp.mean((loss_abn + loss_nor) ** 2)
    ref = loss_cls + alpha * loss_rtfm

    assert jnp.allclose(loss, ref, rtol=1e-5, atol=1e-5), (loss, ref)
    print("KERNEL_OK")
</pallas_src>

<mosaic_0001>
module attributes {stable_mosaic.version = 11 : i64} {
  func.func @_rtfm_kernel(%arg0: memref<2x2xf32, #tpu.memory_space<vmem>>, %arg1: memref<2x8x32xf32, #tpu.memory_space<vmem>>, %arg2: memref<2x8x32xf32, #tpu.memory_space<vmem>>, %arg3: memref<1x1xf32, #tpu.memory_space<smem>>) attributes {dimension_semantics = [], scalar_prefetch = 0 : i64, scratch_operands = 0 : i64, tpu.core_type = #tpu.core_type<tc>} {
    %c0 = arith.constant 0 : index
    %c0_0 = arith.constant 0 : index
    %0 = vector.load %arg0[%c0, %c0_0] : memref<2x2xf32, #tpu.memory_space<vmem>>, vector<1x2xf32>
    %c1 = arith.constant 1 : index
    %c0_1 = arith.constant 0 : index
    %1 = vector.load %arg0[%c1, %c0_1] : memref<2x2xf32, #tpu.memory_space<vmem>>, vector<1x2xf32>
    %2 = math.log %0 : vector<1x2xf32>
    %cst = arith.constant -1.000000e+02 : f32
    %3 = vector.broadcast %cst : f32 to vector<1x2xf32>
    %4 = arith.maximumf %2, %3 : vector<1x2xf32>
    %cst_2 = arith.constant 1.000000e+00 : f32
    %5 = vector.broadcast %cst_2 : f32 to vector<1x2xf32>
    %6 = arith.subf %5, %0 : vector<1x2xf32>
    %7 = math.log %6 : vector<1x2xf32>
    %cst_3 = arith.constant -1.000000e+02 : f32
    %8 = vector.broadcast %cst_3 : f32 to vector<1x2xf32>
    %9 = arith.maximumf %7, %8 : vector<1x2xf32>
    %10 = arith.mulf %1, %4 : vector<1x2xf32>
    %cst_4 = arith.constant 1.000000e+00 : f32
    %11 = vector.broadcast %cst_4 : f32 to vector<1x2xf32>
    %12 = arith.subf %11, %1 : vector<1x2xf32>
    %13 = arith.mulf %12, %9 : vector<1x2xf32>
    %14 = arith.addf %10, %13 : vector<1x2xf32>
    %cst_5 = arith.constant 0.000000e+00 : f32
    %15 = vector.broadcast %cst_5 : f32 to vector<1x2xf32>
    %16 = arith.subf %15, %14 : vector<1x2xf32>
    %17 = vector.shape_cast %16 : vector<1x2xf32> to vector<1x1x2xf32>
    %cst_6 = arith.constant dense<0.000000e+00> : vector<1xf32>
    %18 = vector.multi_reduction <add>, %17, %cst_6 [1, 2] : vector<1x1x2xf32> to vector<1xf32>
    %19 = vector.shape_cast %18 : vector<1xf32> to vector<1x1x1xf32>
    %20 = vector.extract %19[0, 0, 0] : f32 from vector<1x1x1xf32>
    %cst_7 = arith.constant 5.000000e-01 : f32
    %21 = arith.mulf %20, %cst_7 : f32
    %c0_8 = arith.constant 0 : index
    %c0_9 = arith.constant 0 : index
    %c0_10 = arith.constant 0 : index
    %22 = vector.load %arg1[%c0_8, %c0_9, %c0_10] : memref<2x8x32xf32, #tpu.memory_space<vmem>>, vector<2x8x32xf32>
    %c0_11 = arith.constant 0 : index
    %c0_12 = arith.constant 0 : index
    %c0_13 = arith.constant 0 : index
    %23 = vector.load %arg2[%c0_11, %c0_12, %c0_13] : memref<2x8x32xf32, #tpu.memory_space<vmem>>, vector<2x8x32xf32>
    %cst_14 = arith.constant dense<0.000000e+00> : vector<2x32xf32>
    %24 = vector.multi_reduction <add>, %22, %cst_14 [1] : vector<2x8x32xf32> to vector<2x32xf32>
    %cst_15 = arith.constant 1.250000e-01 : f32
    %25 = vector.broadcast %cst_15 : f32 to vector<2x32xf32>
    %26 = arith.mulf %24, %25 : vector<2x32xf32>
    %cst_16 = arith.constant dense<0.000000e+00> : vector<2x32xf32>
    %27 = vector.multi_reduction <add>, %23, %cst_16 [1] : vector<2x8x32xf32> to vector<2x32xf32>
    %cst_17 = arith.constant 1.250000e-01 : f32
    %28 = vector.broadcast %cst_17 : f32 to vector<2x32xf32>
    %29 = arith.mulf %27, %28 : vector<2x32xf32>
    %30 = arith.mulf %26, %26 : vector<2x32xf32>
    %cst_18 = arith.constant dense<0.000000e+00> : vector<2xf32>
    %31 = vector.multi_reduction <add>, %30, %cst_18 [1] : vector<2x32xf32> to vector<2xf32>
    %32 = vector.shape_cast %31 : vector<2xf32> to vector<2x1xf32>
    %33 = math.sqrt %32 : vector<2x1xf32>
    %34 = arith.mulf %29, %29 : vector<2x32xf32>
    %cst_19 = arith.constant dense<0.000000e+00> : vector<2xf32>
    %35 = vector.multi_reduction <add>, %34, %cst_19 [1] : vector<2x32xf32> to vector<2xf32>
    %36 = vector.shape_cast %35 : vector<2xf32> to vector<2x1xf32>
    %37 = math.sqrt %36 : vector<2x1xf32>
    %cst_20 = arith.constant 1.000000e+02 : f32
    %38 = vector.broadcast %cst_20 : f32 to vector<2x1xf32>
    %39 = arith.subf %38, %37 : vector<2x1xf32>
    %40 = math.absf %39 : vector<2x1xf32>
    %41 = arith.addf %40, %33 : vector<2x1xf32>
    %42 = arith.mulf %41, %41 : vector<2x1xf32>
    %43 = vector.shape_cast %42 : vector<2x1xf32> to vector<1x2x1xf32>
    %cst_21 = arith.constant dense<0.000000e+00> : vector<1xf32>
    %44 = vector.multi_reduction <add>, %43, %cst_21 [1, 2] : vector<1x2x1xf32> to vector<1xf32>
    %45 = vector.shape_cast %44 : vector<1xf32> to vector<1x1x1xf32>
    %46 = vector.extract %45[0, 0, 0] : f32 from vector<1x1x1xf32>
    %cst_22 = arith.constant 5.000000e-01 : f32
    %47 = arith.mulf %46, %cst_22 : f32
    %cst_23 = arith.constant 9.99999974E-5 : f32
    %48 = arith.mulf %cst_23, %47 : f32
    %49 = arith.addf %21, %48 : f32
    %c0_24 = arith.constant 0 : index
    %c0_25 = arith.constant 0 : index
    %50 = memref.load %arg3[%c0_24, %c0_25] : memref<1x1xf32, #tpu.memory_space<smem>>
    memref.store %49, %arg3[%c0_24, %c0_25] : memref<1x1xf32, #tpu.memory_space<smem>>
    return
  }
}

</mosaic_0001>

<llo_original>
// kernel: tpu_custom_call.1
$region0: #{tpu_custom_call.1}
  #allocation0 [shape = 'u32[]', space=smem, size = 0x4, offset = 0x4, fixed_abs, tag = 'smem constant byte address 0x4 - core index']
  #allocation1 [shape = 'u32[144,128]{1,0:T(1,128)}', space=vmem, size = 0x12000, scoped, tag = 'internal scratch']
  %s0 = inlined_call_operand.hbm [shape: f32[2,2], index: 0, kind: input, shape index: {}]
  %s1 = inlined_call_operand.hbm [shape: f32[2,8,32], index: 1, kind: input, shape index: {}]
  %s2 = inlined_call_operand.hbm [shape: f32[2,8,32], index: 2, kind: input, shape index: {}]
  %s3 = inlined_call_operand.hbm [shape: f32[1,1], index: 3, kind: output, shape index: {}]
  %s4 = sld [smem:[#allocation0]]
  $region34: #{tpu_custom_call.1} parent=0
    _
  %s6 = ssub.s32 1, %s4
  %s7 = scalar_select 0, %s6, %s4
  $region1: #{tpu_custom_call.1} parent=0
    #allocation2 [shape = 'u8[1024]{0}', space=vmem, size = 0x400, scoped, tag = 'input window, operand 0, single buffered']
    #allocation3 [shape = 's32[1]{0}', space=sflag, size = 0x4, scoped, tag = 'scoped memory for tpu_custom_call.1']
    #allocation4 [shape = 's32[1]{0}', space=sflag, size = 0x4, scoped, tag = 'scoped memory for tpu_custom_call.1']
    #allocation5 [shape = 'u8[8192]{0}', space=vmem, size = 0x2000, scoped, tag = 'input window, operand 1, single buffered']
    #allocation6 [shape = 's32[1]{0}', space=sflag, size = 0x4, scoped, tag = 'scoped memory for tpu_custom_call.1']
    #allocation7 [shape = 'u8[8192]{0}', space=vmem, size = 0x2000, scoped, tag = 'input window, operand 2, single buffered']
    #allocation8 [shape = 'u8[512]{0}', space=smem, size = 0x200, scoped, tag = 'output window, operand 0, single buffered']
    %8 = vsyncpa [#allocation3], 0
    %9 = vsyncpa [#allocation6], 0
    %10 = vsyncpa [#allocation4], 0
    // Predicated region
    $region2: #{tpu_custom_call.1} parent=1 // pred_check
      _
    $region3: #{tpu_custom_call.1} parent=1 // pred_check_branch
      %12 = sbr.rel (0) target = $region5
    $region4: #{tpu_custom_call.1} parent=1 // pred_region
      %s14 = ssub.s32 32, 32
      %15 = vsyncadd [#allocation3], %s14
      %s17 = sshll.u32 [#allocation2], 4
      %s18 = int_to_ptr.vmem [resolvable:$true] %s17
      %20 = dma.hbm_to_vmem [thread:$0]  %s0, 32, %s18, [#allocation3]
    $region5: #{tpu_custom_call.1} parent=1 // pred_fallthru
      _
    // Predicated region
    $region6: #{tpu_custom_call.1} parent=1 // pred_check
      _
    $region7: #{tpu_custom_call.1} parent=1 // pred_check_branch
      %22 = sbr.rel (0) target = $region9
    $region8: #{tpu_custom_call.1} parent=1 // pred_region
      %s24 = ssub.s32 256, 256
      %25 = vsyncadd [#allocation6], %s24
      %s26 = sshll.u32 [#allocation5], 4
      %s27 = int_to_ptr.vmem [resolvable:$true] %s26
      %32 = dma.hbm_to_vmem [thread:$0]  %s1, 256, %s27, [#allocation6], 128, 128, 8
    $region9: #{tpu_custom_call.1} parent=1 // pred_fallthru
      _
    // Predicated region
    $region10: #{tpu_custom_call.1} parent=1 // pred_check
      _
    $region11: #{tpu_custom_call.1} parent=1 // pred_check_branch
      %34 = sbr.rel (0) target = $region13
    $region12: #{tpu_custom_call.1} parent=1 // pred_region
      %s36 = ssub.s32 256, 256
      %37 = vsyncadd [#allocation6], %s36
      %s38 = sshll.u32 [#allocation7], 4
      %s39 = int_to_ptr.vmem [resolvable:$true] %s38
      %44 = dma.hbm_to_vmem [thread:$0]  %s2, 256, %s39, [#allocation6], 128, 128, 8
    $region13: #{tpu_custom_call.1} parent=1 // pred_fallthru
      _
    // Predicated region
    $region14: #{tpu_custom_call.1} parent=1 // pred_check
      _
    $region15: #{tpu_custom_call.1} parent=1 // pred_check_branch
      %46 = sbr.rel (0) target = $region17
    $region16: #{tpu_custom_call.1} parent=1 // pred_region
      %47 = dma.done [#allocation3], 32
    $region17: #{tpu_custom_call.1} parent=1 // pred_fallthru
      _
    // Predicated region
    $region18: #{tpu_custom_call.1} parent=1 // pred_check
      _
    $region19: #{tpu_custom_call.1} parent=1 // pred_check_branch
      %49 = sbr.rel (0) target = $region21
    $region20: #{tpu_custom_call.1} parent=1 // pred_region
      %50 = dma.done [#allocation6], 256
    $region21: #{tpu_custom_call.1} parent=1 // pred_fallthru
      _
    // Predicated region
    $region22: #{tpu_custom_call.1} parent=1 // pred_check
      _
    $region23: #{tpu_custom_call.1} parent=1 // pred_check_branch
      %52 = sbr.rel (0) target = $region25
    $region24: #{tpu_custom_call.1} parent=1 // pred_region
      %53 = dma.done [#allocation6], 256
    $region25: #{tpu_custom_call.1} parent=1 // pred_fallthru
      _
    %v54 = vld [vmem:[#allocation2] sm:$0x1]
    %v55 = vld [vmem:[#allocation2 + $0x1] sm:$0x1]
    %v56 = vlog2.pop %v54
    %v57 = vmul.f32 %v56, 0.6931472
    %v58 = vmax.f32 %v57, -100.0
    %v59 = vsub.f32 1.0, %v54
    %v60 = vlog2.pop %v59
    %v61 = vmul.f32 %v60, 0.6931472
    %v62 = vmax.f32 %v61, -100.0
    %v63 = vmul.f32 %v55, %v58
    %v64 = vsub.f32 1.0, %v55
    %v65 = vmul.f32 %v64, %v62
    %v66 = vadd.f32 %v63, %v65
    %v67 = vsub.f32 0.0, %v66
    %vm68 = vcmask 8192
    %v69 = vsel %vm68, %v67, 0.0
    %70 = vadd.xlane.f32.xlu0 %v69
    %v71 = vpop.xlane.xlu0 %70
    %v72 = vrot.slane %v71, 4
    %v73 = vadd.f32 %v71, %v72
    %v74 = vrot.slane %v73, 2
    %v75 = vadd.f32 %v73, %v74
    %v76 = vrot.slane %v75, 1
    %v77 = vadd.f32 %v75, %v76
    %s78 = vtos %v77
    %s79 = smul.f32 %s78, 0.5
    %v80 = vld [vmem:[#allocation5] sm:$0xff]
    %v81 = vld [vmem:[#allocation5 + $0x8] sm:$0xff]
    %v82 = vld [vmem:[#allocation7] sm:$0xff]
    %v83 = vld [vmem:[#allocation7 + $0x8] sm:$0xff]
    %vm84 = vcmask 261120
    %v85 = vsel %vm84, %v80, 0.0
    %v86 = vrot.slane %v85, 4
    %v87 = vadd.f32 %v85, %v86
    %v88 = vrot.slane %v87, 2
    %v89 = vadd.f32 %v87, %v88
    %v90 = vrot.slane %v89, 1
    %v91 = vadd.f32 %v89, %v90
    %v92 = vsel %vm84, %v81, 0.0
    %v93 = vrot.slane %v92, 4
    %v94 = vadd.f32 %v92, %v93
    %v95 = vrot.slane %v94, 2
    %v96 = vadd.f32 %v94, %v95
    %v97 = vrot.slane %v96, 1
    %v98 = vadd.f32 %v96, %v97
    %v99 = vmul.f32 %v91, 0.125
    %v100 = vmul.f32 %v98, 0.125
    %v101 = vsel %vm84, %v82, 0.0
    %v102 = vrot.slane %v101, 4
    %v103 = vadd.f32 %v101, %v102
    %v104 = vrot.slane %v103, 2
    %v105 = vadd.f32 %v103, %v104
    %v106 = vrot.slane %v105, 1
    %v107 = vadd.f32 %v105, %v106
    %v108 = vsel %vm84, %v83, 0.0
    %v109 = vrot.slane %v108, 4
    %v110 = vadd.f32 %v108, %v109
    %v111 = vrot.slane %v110, 2
    %v112 = vadd.f32 %v110, %v111
    %v113 = vrot.slane %v112, 1
    %v114 = vadd.f32 %v112, %v113
    %v115 = vmul.f32 %v107, 0.125
    %v116 = vmul.f32 %v114, 0.125
    %v117 = vmul.f32 %v99, %v99
    %v118 = vmul.f32 %v100, %v100
    %vm121 = vcmask 1041409
    %v122 = vsel %vm121, %v118, %v117
    %vm124 = vcmask 254976
    %v125 = vsel %vm124, %v122, 0.0
    %126 = vadd.xlane.f32.xlu0 %v125
    %v127 = vpop.xlane.xlu0 %126
    %v128 = vrsqrt.pop %v127
    %v129 = vmul.f32 %v127, %v128
    %vm130 = vcmp.eq.f32.partialorder %v127, inf
    %v131 = vsel %vm130, %v127, %v129
    %vm132 = vcmp.eq.f32.partialorder %v127, 0.0
    %v133 = vand.u32 %v127, 2147483648
    %v134 = vsel %vm132, %v133, %v131
    %v135 = vmul.f32 %v115, %v115
    %v136 = vmul.f32 %v116, %v116
    %v139 = vsel %vm121, %v136, %v135
    %v141 = vsel %vm124, %v139, 0.0
    %142 = vadd.xlane.f32.xlu0 %v141
    %v143 = vpop.xlane.xlu0 %142
    %v144 = vrsqrt.pop %v143
    %v145 = vmul.f32 %v143, %v144
    %vm146 = vcmp.eq.f32.partialorder %v143, inf
    %v147 = vsel %vm146, %v143, %v145
    %vm148 = vcmp.eq.f32.partialorder %v143, 0.0
    %v149 = vand.u32 %v143, 2147483648
    %v150 = vsel %vm148, %v149, %v147
    %v151 = vsub.f32 100.0, %v150
    %v152 = vand.u32 2147483647, %v151
    %v153 = vadd.f32 %v152, %v134
    %v154 = vmul.f32 %v153, %v153
    %vm155 = vcmask 1024
    %v156 = vsel %vm155, %v154, 0.0
    %157 = vadd.xlane.f32.xlu0 %v156
    %v158 = vpop.xlane.xlu0 %157
    %v159 = vrot.slane %v158, 4
    %v160 = vadd.f32 %v158, %v159
    %v161 = vrot.slane %v160, 2
    %v162 = vadd.f32 %v160, %v161
    %v163 = vrot.slane %v162, 1
    %v164 = vadd.f32 %v162, %v163
    %s165 = vtos %v164
    %s166 = smul.f32 %s165, 0.5
    %s167 = smul.f32 %s166, 0.0001
    %s168 = sadd.f32 %s79, %s167
    %s169 = scalar_lea.smem [#allocation8], 0
    %170 = sst [smem:[%s169]] %s168
    // Predicated region
    $region26: #{tpu_custom_call.1} parent=1 // pred_check
      _
    $region27: #{tpu_custom_call.1} parent=1 // pred_check_branch
      %172 = sbr.rel (0) target = $region29
    $region28: #{tpu_custom_call.1} parent=1 // pred_region
      %s174 = ssub.s32 16, 16
      %175 = vsyncadd [#allocation4], %s174
      %178 = dma.smem_to_hbm [#allocation8], 16, %s3, [#allocation4]
    $region29: #{tpu_custom_call.1} parent=1 // pred_fallthru
      _
    // Predicated region
    $region30: #{tpu_custom_call.1} parent=1 // pred_check
      _
    $region31: #{tpu_custom_call.1} parent=1 // pred_check_branch
      %180 = sbr.rel (0) target = $region33
    $region32: #{tpu_custom_call.1} parent=1 // pred_region
      %181 = dma.done [#allocation4], 16
    $region33: #{tpu_custom_call.1} parent=1 // pred_fallthru
      _
    %182 = sfence
    %183 = vsyncpa [#allocation3], 1
    %184 = vsyncpa [#allocation6], 1
    %185 = vsyncpa [#allocation4], 1

</llo_original>
